<compile_context>
chip_gen: v5e
topology: v5e:2x2
jax: 0.10.0
libtpu: 0.0.40
codegen_flags: <defaults>
</compile_context>

<pallas_src>
import functools

import jax
import jax.numpy as jnp
from jax.experimental import pallas as pl
from jax.experimental.pallas import tpu as pltpu

HIDDEN_DIM = 100   # torch module's hidden size
HIDDEN_PAD = 128   # lane-padded hidden width
OUT_PAD = 128      # lane-dense fused output width: [policy | value | zeros]


def actor_critic_kernel(x_ref, w1_ref, b1_ref, w23_ref, b23_ref, out_ref):
    # Cast x to the weights' dtype IN-KERNEL (free VPU work, no extra HBM pass).
    x = x_ref[...].astype(w1_ref.dtype)
    # Shared base: one MXU matmul; bias add + ReLU stay f32 on the VPU
    # (v5e-safe: no bf16 VPU needed in the epilogue).
    base = jnp.dot(x, w1_ref[...], preferred_element_type=jnp.float32)
    base = jnp.maximum(base + b1_ref[...], 0.0)
    # Fused policy+value heads: a single lane-dense [TB, 128] output matmul.
    out = jnp.dot(base.astype(w23_ref.dtype), w23_ref[...],
                  preferred_element_type=jnp.float32) + b23_ref[...]
    out_ref[...] = out.astype(out_ref.dtype)


def fuse_and_pad_params(params, compute_dtype=jnp.float32):
    """Pad hidden 100->128 and fuse the two heads into one [128, 128] weight.

    All padded rows/columns and padded bias entries are EXACT zeros, so in f32
    the result is bit-equivalent to the unpadded model (adding 0.0 is exact).
    With compute_dtype=bf16 the matmul inputs are bf16 (2x MXU throughput on
    v6e/v7x, half the resident-weight footprint); biases stay f32."""
    num_inputs = params["w1"].shape[0]
    num_actions = params["w2"].shape[1]
    assert num_actions + 1 <= OUT_PAD, "fused head assumes num_actions + 1 <= 128"

    w1 = jnp.zeros((num_inputs, HIDDEN_PAD), jnp.float32)
    w1 = w1.at[:, :HIDDEN_DIM].set(params["w1"])
    b1 = jnp.zeros((1, HIDDEN_PAD), jnp.float32).at[:, :HIDDEN_DIM].set(params["b1"])

    w23 = jnp.zeros((HIDDEN_PAD, OUT_PAD), jnp.float32)
    w23 = w23.at[:HIDDEN_DIM, :num_actions].set(params["w2"])
    w23 = w23.at[:HIDDEN_DIM, num_actions:num_actions + 1].set(params["w3"])
    b23 = jnp.zeros((1, OUT_PAD), jnp.float32)
    b23 = b23.at[:, :num_actions].set(params["b2"])
    b23 = b23.at[:, num_actions:num_actions + 1].set(params["b3"])

    return {
        "w1": w1.astype(compute_dtype),
        "b1": b1,                         # bias add / ReLU stay f32
        "w23": w23.astype(compute_dtype),
        "b23": b23,
    }


def actor_critic_forward(x, fused, num_actions, *, block_b=4096,
                         out_dtype=jnp.float32, return_slab=False):
    """x: [B, num_inputs]. fused: output of fuse_and_pad_params.

    Returns (policy [B, num_actions], value [B, 1]) or, with return_slab=True,
    the raw [B, 128] slab (policy in cols [:num_actions], value in
    col [num_actions]) so downstream ops can consume it without extra slices."""
    B, num_inputs = x.shape

    # Batch tile: as large as block_b allows (HBM-bound -> bigger is better),
    # multiple of 8 sublanes, but capped so v7x's two TensorCores each get at
    # least one tile when B permits.  v5e/v6e (single TC) are unaffected.
    half_b = ((max(B // 2, 1) + 7) // 8) * 8
    tb = max(8, min(block_b, half_b))
    grid_b = pl.cdiv(B, tb)          # ragged last block: OOB reads are garbage
                                     # (rows are independent), OOB writes masked.

    def resident(shape):
        # Weights / biases: same block every grid step -> stays resident in VMEM.
        return pl.BlockSpec(shape, lambda i: (0, 0))

    # VMEM budget (double-buffered x + out tiles, resident weights) + headroom;
    # >= 32 MiB so big tiles also compile on v5e's 16 MiB default scoped VMEM,
    # <= 64 MiB so we never ask for more than v7x's physical VMEM.
    bpe = jnp.dtype(fused["w1"].dtype).itemsize
    est = (2 * tb * num_inputs * bpe                       # x tiles
           + 2 * tb * OUT_PAD * jnp.dtype(out_dtype).itemsize  # out tiles
           + (num_inputs + HIDDEN_PAD + 2) * HIDDEN_PAD * 4    # weights/biases
           + (1 << 20))
    vmem_limit = int(min(max(2 * est, 32 << 20), 64 << 20))

    out = pl.pallas_call(
        actor_critic_kernel,
        out_shape=jax.ShapeDtypeStruct((B, OUT_PAD), out_dtype),
        grid=(grid_b,),
        in_specs=[
            pl.BlockSpec((tb, num_inputs), lambda i: (i, 0)),  # x tile (pipelined)
            resident((num_inputs, HIDDEN_PAD)),                # W1
            resident((1, HIDDEN_PAD)),                         # b1
            resident((HIDDEN_PAD, OUT_PAD)),                   # fused [W2 | W3]
            resident((1, OUT_PAD)),                            # fused [b2 | b3]
        ],
        out_specs=pl.BlockSpec((tb, OUT_PAD), lambda i: (i, 0)),
        compiler_params=pltpu.CompilerParams(
            dimension_semantics=("parallel",),                 # megacore on v7x
            vmem_limit_bytes=vmem_limit),
    )(x, fused["w1"], fused["b1"], fused["w23"], fused["b23"])

    if return_slab:
        return out
    policy = out[:, :num_actions]
    value = out[:, num_actions:num_actions + 1]
    return policy, value


def init_params(key, num_inputs, num_actions, hidden_dim=HIDDEN_DIM):
    """torch.nn.Linear-style init (uniform +- 1/sqrt(fan_in)); weights stored
    pre-transposed as [in_features, out_features]."""
    k1, k2, k3, k4, k5, k6 = jax.random.split(key, 6)

    def lin(kw, kb, fan_in, fan_out):
        bound = 1.0 / jnp.sqrt(jnp.float32(fan_in))
        w = jax.random.uniform(kw, (fan_in, fan_out), jnp.float32, -bound, bound)
        b = jax.random.uniform(kb, (1, fan_out), jnp.float32, -bound, bound)
        return w, b

    w1, b1 = lin(k1, k2, num_inputs, hidden_dim)
    w2, b2 = lin(k3, k4, hidden_dim, num_actions)
    w3, b3 = lin(k5, k6, hidden_dim, 1)
    return {"w1": w1, "b1": b1, "w2": w2, "b2": b2, "w3": w3, "b3": b3}


def reference_forward(x, p):
    base = jnp.maximum(x @ p["w1"] + p["b1"], 0.0)
    return base @ p["w2"] + p["b2"], base @ p["w3"] + p["b3"]


if __name__ == "__main__":
    num_inputs, num_actions, batch = 32, 4, 8

    key = jax.random.PRNGKey(0)
    kx, kp = jax.random.split(key)
    x = jax.random.normal(kx, (batch, num_inputs), jnp.float32)
    params = init_params(kp, num_inputs, num_actions)
    ref_policy, ref_value = reference_forward(x, params)

    # --- exact f32 path (default) -------------------------------------------
    fused_f32 = fuse_and_pad_params(params)  # pad + fuse ONCE, outside kernel
    fwd = jax.jit(functools.partial(actor_critic_forward, num_actions=num_actions))
    policy, value = jax.block_until_ready(fwd(x, fused_f32))

    assert policy.shape == (batch, num_actions)
    assert value.shape == (batch, 1)
    assert jnp.allclose(policy, ref_policy, atol=1e-5, rtol=1e-5)
    assert jnp.allclose(value, ref_value, atol=1e-5, rtol=1e-5)
    assert jnp.all(jnp.isfinite(policy)) and jnp.all(jnp.isfinite(value))

    # --- bf16 matmul path (2x MXU on v6e/v7x), relaxed tolerance -------------
    fused_bf16 = fuse_and_pad_params(params, compute_dtype=jnp.bfloat16)
    policy_b, value_b = jax.block_until_ready(fwd(x, fused_bf16))
    assert jnp.allclose(policy_b, ref_policy, atol=5e-2, rtol=5e-2)
    assert jnp.allclose(value_b, ref_value, atol=5e-2, rtol=5e-2)

    print("KERNEL_OK")
</pallas_src>

<mosaic_0001>
module attributes {stable_mosaic.version = 11 : i64} {
  func.func @actor_critic_kernel(%arg0: i32, %arg1: memref<8x32xf32, #tpu.memory_space<vmem>>, %arg2: memref<32x128xf32, #tpu.memory_space<vmem>>, %arg3: memref<1x128xf32, #tpu.memory_space<vmem>>, %arg4: memref<128x128xf32, #tpu.memory_space<vmem>>, %arg5: memref<1x128xf32, #tpu.memory_space<vmem>>, %arg6: memref<8x128xf32, #tpu.memory_space<vmem>>) attributes {dimension_semantics = [#tpu.dimension_semantics<parallel>], iteration_bounds = array<i64: 1>, scalar_prefetch = 0 : i64, scratch_operands = 0 : i64, tpu.core_type = #tpu.core_type<tc>, window_params = [{transform_indices = @transform_0, window_bounds = array<i64: 8, 32>}, {pipeline_mode = #tpu.pipeline_mode<synchronous>, transform_indices = @transform_1, window_bounds = array<i64: 32, 128>}, {pipeline_mode = #tpu.pipeline_mode<synchronous>, transform_indices = @transform_2, window_bounds = array<i64: 1, 128>}, {pipeline_mode = #tpu.pipeline_mode<synchronous>, transform_indices = @transform_3, window_bounds = array<i64: 128, 128>}, {pipeline_mode = #tpu.pipeline_mode<synchronous>, transform_indices = @transform_4, window_bounds = array<i64: 1, 128>}, {transform_indices = @transform_5, window_bounds = array<i64: 8, 128>}]} {
    %c0 = arith.constant 0 : index
    %c0_0 = arith.constant 0 : index
    %0 = vector.load %arg1[%c0, %c0_0] : memref<8x32xf32, #tpu.memory_space<vmem>>, vector<8x32xf32>
    %c0_1 = arith.constant 0 : index
    %c0_2 = arith.constant 0 : index
    %1 = vector.load %arg2[%c0_1, %c0_2] : memref<32x128xf32, #tpu.memory_space<vmem>>, vector<32x128xf32>
    %cst = arith.constant dense<0.000000e+00> : vector<8x128xf32>
    %2 = tpu.matmul %0, %1, %cst {dimension_numbers = #tpu.dot_dimension_numbers<[1], [0], [0], [1], [0, 0, 1, 1], [], []>} : vector<8x32xf32>, vector<32x128xf32>, vector<8x128xf32> -> vector<8x128xf32>
    %c0_3 = arith.constant 0 : index
    %c0_4 = arith.constant 0 : index
    %3 = vector.load %arg3[%c0_3, %c0_4] : memref<1x128xf32, #tpu.memory_space<vmem>>, vector<1x128xf32>
    %4 = vector.broadcast %3 : vector<1x128xf32> to vector<8x128xf32>
    %5 = arith.addf %2, %4 : vector<8x128xf32>
    %cst_5 = arith.constant 0.000000e+00 : f32
    %6 = vector.broadcast %cst_5 : f32 to vector<8x128xf32>
    %7 = arith.maximumf %5, %6 : vector<8x128xf32>
    %c0_6 = arith.constant 0 : index
    %c0_7 = arith.constant 0 : index
    %8 = vector.load %arg4[%c0_6, %c0_7] : memref<128x128xf32, #tpu.memory_space<vmem>>, vector<128x128xf32>
    %cst_8 = arith.constant dense<0.000000e+00> : vector<8x128xf32>
    %9 = tpu.matmul %7, %8, %cst_8 {dimension_numbers = #tpu.dot_dimension_numbers<[1], [0], [0], [1], [0, 0, 1, 1], [], []>} : vector<8x128xf32>, vector<128x128xf32>, vector<8x128xf32> -> vector<8x128xf32>
    %c0_9 = arith.constant 0 : index
    %c0_10 = arith.constant 0 : index
    %10 = vector.load %arg5[%c0_9, %c0_10] : memref<1x128xf32, #tpu.memory_space<vmem>>, vector<1x128xf32>
    %11 = vector.broadcast %10 : vector<1x128xf32> to vector<8x128xf32>
    %12 = arith.addf %9, %11 : vector<8x128xf32>
    %c0_11 = arith.constant 0 : index
    %c0_12 = arith.constant 0 : index
    %13 = vector.load %arg6[%c0_11, %c0_12] : memref<8x128xf32, #tpu.memory_space<vmem>>, vector<8x128xf32>
    tpu.vector_store %arg6[%c0_11, %c0_12], %12 {strides = array<i32>} : memref<8x128xf32, #tpu.memory_space<vmem>>, vector<8x128xf32>,
    return
  }
  func.func @transform_0(%arg0: i32) -> (i32, i32) {
    %c0_i32 = arith.constant 0 : i32
    %c0_i32_0 = arith.constant 0 : i32
    return %arg0, %c0_i32 : i32, i32
  }
  func.func @transform_1(%arg0: i32) -> (i32, i32) {
    %c0_i32 = arith.constant 0 : i32
    %c0_i32_0 = arith.constant 0 : i32
    %c0_i32_1 = arith.constant 0 : i32
    return %c0_i32, %c0_i32_0 : i32, i32
  }
  func.func @transform_2(%arg0: i32) -> (i32, i32) {
    %c0_i32 = arith.constant 0 : i32
    %c0_i32_0 = arith.constant 0 : i32
    %c0_i32_1 = arith.constant 0 : i32
    return %c0_i32, %c0_i32_0 : i32, i32
  }
  func.func @transform_3(%arg0: i32) -> (i32, i32) {
    %c0_i32 = arith.constant 0 : i32
    %c0_i32_0 = arith.constant 0 : i32
    %c0_i32_1 = arith.constant 0 : i32
    return %c0_i32, %c0_i32_0 : i32, i32
  }
  func.func @transform_4(%arg0: i32) -> (i32, i32) {
    %c0_i32 = arith.constant 0 : i32
    %c0_i32_0 = arith.constant 0 : i32
    %c0_i32_1 = arith.constant 0 : i32
    return %c0_i32, %c0_i32_0 : i32, i32
  }
  func.func @transform_5(%arg0: i32) -> (i32, i32) {
    %c0_i32 = arith.constant 0 : i32
    %c0_i32_0 = arith.constant 0 : i32
    return %arg0, %c0_i32 : i32, i32
  }
}

</mosaic_0001>

<llo_original>
// kernel: actor_critic_forward.1
$region0: #{actor_critic_forward.1}
  #allocation0 [shape = 'u32[]', space=smem, size = 0x4, offset = 0x4, fixed_abs, tag = 'smem constant byte address 0x4 - core index']
  #allocation1 [shape = 'u32[72,128]{1,0:T(1,128)}', space=vmem, size = 0x9000, scoped, tag = 'internal scratch']
  %s0 = inlined_call_operand.hbm [shape: f32[8,32], index: 0, kind: input, shape index: {}]
  %s1 = inlined_call_operand.hbm [shape: f32[32,128], index: 1, kind: input, shape index: {}]
  %s2 = inlined_call_operand.vmem [shape: f32[1,128], index: 2, kind: input, shape index: {}]
  %s3 = inlined_call_operand.hbm [shape: f32[128,128], index: 3, kind: input, shape index: {}]
  %s4 = inlined_call_operand.vmem [shape: f32[1,128], index: 4, kind: input, shape index: {}]
  %s5 = inlined_call_operand.vmem [shape: f32[8,128], index: 5, kind: output, shape index: {}]
  %s6 = sld [smem:[#allocation0]]
  $region42: #{actor_critic_forward.1} parent=0
    _
  %s8 = ssub.s32 1, %s6
  %s9 = scalar_select 0, %s8, %s6
  $region1: #{actor_critic_forward.1} parent=0
    #allocation2 [shape = 'u8[4096]{0}', space=vmem, size = 0x1000, scoped, tag = 'input window, operand 0, single buffered']
    #allocation3 [shape = 's32[1]{0}', space=sflag, size = 0x4, scoped, tag = 'scoped memory for actor_critic_forward.1']
    #allocation4 [shape = 'u8[16384]{0}', space=vmem, size = 0x4000, scoped, tag = 'input window, operand 1, single buffered']
    #allocation5 [shape = 's32[1]{0}', space=sflag, size = 0x4, scoped, tag = 'scoped memory for actor_critic_forward.1']
    #allocation6 [shape = 'u8[65536]{0}', space=vmem, size = 0x10000, scoped, tag = 'input window, operand 3, single buffered']
    %10 = vsyncpa [#allocation3], 0
    %11 = vsyncpa [#allocation5], 0
    // Predicated region
    $region2: #{actor_critic_forward.1} parent=1 // pred_check
      _
    $region3: #{actor_critic_forward.1} parent=1 // pred_check_branch
      %13 = sbr.rel (0) target = $region5
    $region4: #{actor_critic_forward.1} parent=1 // pred_region
      %15 = vsyncadd [#allocation3], 0
      %s17 = sshll.u32 %s0, 4
      %s18 = int_to_ptr.hbm [resolvable:$true] %s17
      %s19 = sshll.u32 [#allocation2], 4
      %s20 = int_to_ptr.vmem [resolvable:$true] %s19
      %22 = dma.hbm_to_vmem [thread:$0]  %s18, 128, %s20, [#allocation3]
    $region5: #{actor_critic_forward.1} parent=1 // pred_fallthru
      _
    // Predicated region
    $region6: #{actor_critic_forward.1} parent=1 // pred_check
      _
    $region7: #{actor_critic_forward.1} parent=1 // pred_check_branch
      %24 = sbr.rel (0) target = $region9
    $region8: #{actor_critic_forward.1} parent=1 // pred_region
      %26 = vsyncadd [#allocation5], 0
      %s27 = sshll.u32 %s1, 4
      %s28 = int_to_ptr.hbm [resolvable:$true] %s27
      %s29 = sshll.u32 [#allocation4], 4
      %s30 = int_to_ptr.vmem [resolvable:$true] %s29
      %35 = dma.hbm_to_vmem [thread:$0]  %s28, 512, %s30, [#allocation5], 128, 128, 8
    $region9: #{actor_critic_forward.1} parent=1 // pred_fallthru
      _
    // Predicated region
    $region10: #{actor_critic_forward.1} parent=1 // pred_check
      _
    $region11: #{actor_critic_forward.1} parent=1 // pred_check_branch
      %37 = sbr.rel (0) target = $region13
    $region12: #{actor_critic_forward.1} parent=1 // pred_region
      _
    $region13: #{actor_critic_forward.1} parent=1 // pred_fallthru
      _
    // Predicated region
    $region14: #{actor_critic_forward.1} parent=1 // pred_check
      _
    $region15: #{actor_critic_forward.1} parent=1 // pred_check_branch
      %39 = sbr.rel (0) target = $region17
    $region16: #{actor_critic_forward.1} parent=1 // pred_region
      %41 = vsyncadd [#allocation5], 0
      %s42 = sshll.u32 %s3, 4
      %s43 = int_to_ptr.hbm [resolvable:$true] %s42
      %s44 = sshll.u32 [#allocation6], 4
      %s45 = int_to_ptr.vmem [resolvable:$true] %s44
      %50 = dma.hbm_to_vmem [thread:$0]  %s43, 2048, %s45, [#allocation5], 128, 128, 8
    $region17: #{actor_critic_forward.1} parent=1 // pred_fallthru
      _
    // Predicated region
    $region18: #{actor_critic_forward.1} parent=1 // pred_check
      _
    $region19: #{actor_critic_forward.1} parent=1 // pred_check_branch
      %52 = sbr.rel (0) target = $region21
    $region20: #{actor_critic_forward.1} parent=1 // pred_region
      _
    $region21: #{actor_critic_forward.1} parent=1 // pred_fallthru
      _
    // Predicated region
    $region22: #{actor_critic_forward.1} parent=1 // pred_check
      _
    $region23: #{actor_critic_forward.1} parent=1 // pred_check_branch
      %54 = sbr.rel (0) target = $region25
    $region24: #{actor_critic_forward.1} parent=1 // pred_region
      %56 = dma.done [#allocation3], 128
    $region25: #{actor_critic_forward.1} parent=1 // pred_fallthru
      _
    // Predicated region
    $region26: #{actor_critic_forward.1} parent=1 // pred_check
      _
    $region27: #{actor_critic_forward.1} parent=1 // pred_check_branch
      %58 = sbr.rel (0) target = $region29
    $region28: #{actor_critic_forward.1} parent=1 // pred_region
      %60 = dma.done [#allocation5], 512
    $region29: #{actor_critic_forward.1} parent=1 // pred_fallthru
      _
    // Predicated region
    $region30: #{actor_critic_forward.1} parent=1 // pred_check
      _
    $region31: #{actor_critic_forward.1} parent=1 // pred_check_branch
      %62 = sbr.rel (0) target = $region33
    $region32: #{actor_critic_forward.1} parent=1 // pred_region
      %64 = dma.done [#allocation5], 2048
    $region33: #{actor_critic_forward.1} parent=1 // pred_fallthru
      _
    %v65 = vld [vmem:[#allocation2] sm:$0xff]
    %v66 = vld [vmem:[#allocation4] sm:$0xff]
    %v67 = vld [vmem:[#allocation4 + $0x8] sm:$0xff]
    %v68 = vld [vmem:[#allocation4 + $0x10] sm:$0xff]
    %v69 = vld [vmem:[#allocation4 + $0x18] sm:$0xff]
    %v70 = vld [vmem:[%s2] sm:$0x1]
    %v72 = vperm.slane %v70, 0
    %vm74 = vcmask 261120
    %v76 = vsel %vm74, %v65, 0
    %78 = vmatpush.msra.mxu0 0.0
    %79 = vmatpush.msra.mxu0 0.0
    %80 = vmatpush.msra.mxu0 0.0
    %81 = vmatpush.msra.mxu0 0.0
    %82 = vmatpush.msra.mxu0 0.0
    %83 = vmatpush.msra.mxu0 0.0
    %84 = vmatpush.msra.mxu0 0.0
    %85 = vmatpush.msra.mxu0 0.0
    %86 = vmatpush.msra.mxu0 0.0
    %87 = vmatpush.msra.mxu0 0.0
    %88 = vmatpush.msra.mxu0 0.0
    %89 = vmatpush.msra.mxu0 0.0
    %90 = vmatpush.msra.mxu0 %v69
    %91 = vmatpush.msra.mxu0 %v68
    %92 = vmatpush.msra.mxu0 %v67
    %93 = vmatpush.msra.mxu0 %v66
    %94 = vmatmul.f32.gmra.mxu0 %v76
    %v95 = vpop.f32.mrf.mxu0
    %v96 = vadd.f32 %v72, %v95
    %97 = vdwg.mxu0
    %v98 = vmax.f32 %v96, 0.0
    %v99 = vld [vmem:[#allocation6] sm:$0xff]
    %v100 = vld [vmem:[#allocation6 + $0x8] sm:$0xff]
    %v101 = vld [vmem:[#allocation6 + $0x10] sm:$0xff]
    %v102 = vld [vmem:[#allocation6 + $0x18] sm:$0xff]
    %v103 = vld [vmem:[#allocation6 + $0x20] sm:$0xff]
    %v104 = vld [vmem:[#allocation6 + $0x28] sm:$0xff]
    %v105 = vld [vmem:[#allocation6 + $0x30] sm:$0xff]
    %v106 = vld [vmem:[#allocation6 + $0x38] sm:$0xff]
    %v107 = vld [vmem:[#allocation6 + $0x40] sm:$0xff]
    %v108 = vld [vmem:[#allocation6 + $0x48] sm:$0xff]
    %v109 = vld [vmem:[#allocation6 + $0x50] sm:$0xff]
    %v110 = vld [vmem:[#allocation6 + $0x58] sm:$0xff]
    %v111 = vld [vmem:[#allocation6 + $0x60] sm:$0xff]
    %v112 = vld [vmem:[#allocation6 + $0x68] sm:$0xff]
    %v113 = vld [vmem:[#allocation6 + $0x70] sm:$0xff]
    %v114 = vld [vmem:[#allocation6 + $0x78] sm:$0xff]
    %v115 = vld [vmem:[%s4] sm:$0x1]
    %v117 = vperm.slane %v115, 0
    %119 = vmatpush.msra.mxu0 %v114
    %120 = vmatpush.msra.mxu0 %v113
    %121 = vmatpush.msra.mxu0 %v112
    %122 = vmatpush.msra.mxu0 %v111
    %123 = vmatpush.msra.mxu0 %v110
    %124 = vmatpush.msra.mxu0 %v109
    %125 = vmatpush.msra.mxu0 %v108
    %126 = vmatpush.msra.mxu0 %v107
    %127 = vmatpush.msra.mxu0 %v106
    %128 = vmatpush.msra.mxu0 %v105
    %129 = vmatpush.msra.mxu0 %v104
    %130 = vmatpush.msra.mxu0 %v103
    %131 = vmatpush.msra.mxu0 %v102
    %132 = vmatpush.msra.mxu0 %v101
    %133 = vmatpush.msra.mxu0 %v100
    %134 = vmatpush.msra.mxu0 %v99
    %135 = vmatmul.f32.gmra.mxu0 %v98
    %v136 = vpop.f32.mrf.mxu0
    %v137 = vadd.f32 %v117, %v136
    %138 = vdwg.mxu0
    %139 = vst [vmem:[%s5] sm:$0xff] %v137
    // Predicated region
    $region34: #{actor_critic_forward.1} parent=1 // pred_check
      _
    $region35: #{actor_critic_forward.1} parent=1 // pred_check_branch
      %141 = sbr.rel (0) target = $region37
    $region36: #{actor_critic_forward.1} parent=1 // pred_region
      _
    $region37: #{actor_critic_forward.1} parent=1 // pred_fallthru
      _
    // Predicated region
    $region38: #{actor_critic_forward.1} parent=1 // pred_check
      _
    $region39: #{actor_critic_forward.1} parent=1 // pred_check_branch
      %143 = sbr.rel (0) target = $region41
    $region40: #{actor_critic_forward.1} parent=1 // pred_region
      _
    $region41: #{actor_critic_forward.1} parent=1 // pred_fallthru
      _
    %144 = vsyncpa [#allocation3], 1
    %145 = vsyncpa [#allocation5], 1

</llo_original>
